<compile_context>
chip_gen: v7x
topology: tpu7x:2x2x1
jax: 0.10.0
libtpu: 0.0.40
codegen_flags: <defaults>
</compile_context>

<pallas_src>
import jax
import jax.numpy as jnp
from jax.experimental import pallas as pl
from jax.experimental.pallas import tpu as pltpu


def build_encoding(
    dim_model: int,
    grid_size: int,
    max_len: float = 10000.0,
    dtype=jnp.float32,
) -> jnp.ndarray:
    """Replicates PositionalEncoding2D.__init__ buffer construction."""
    assert dim_model % 4 == 0, "dim_model must be divisible by 4"
    pos = jnp.arange(grid_size, dtype=jnp.float32)
    # torch.meshgrid default is 'ij' indexing.
    grid_w, grid_h = jnp.meshgrid(pos, pos, indexing="ij")

    def get_1d_encoding(num_dims: int, positions: jnp.ndarray) -> jnp.ndarray:
        positions = positions.reshape(-1, 1)
        half_dim = num_dims // 2
        i = jnp.arange(half_dim, dtype=jnp.float32)
        denominator = jnp.power(jnp.float32(max_len), i / half_dim)
        enc_sin = jnp.sin(positions / denominator)
        enc_cos = jnp.cos(positions / denominator)
        return jnp.concatenate([enc_sin, enc_cos], axis=-1)

    enc_w = get_1d_encoding(dim_model // 2, grid_w.reshape(-1))
    enc_h = get_1d_encoding(dim_model // 2, grid_h.reshape(-1))
    enc = jnp.concatenate([enc_w, enc_h], axis=-1)  # [S, D], float32
    return enc.astype(dtype)


def _add_pe_kernel(x_ref, enc_ref, o_ref):
    # x_ref: (Bt, Lt) tile; enc_ref: (1, Lt) tile -> broadcast add over sublanes.
    o_ref[...] = x_ref[...] + enc_ref[...]


def _choose_tiles(B: int, L: int, itemsize: int, target_block_bytes: int):
    """Pick a lane-dense (bt, lt) block of ~target_block_bytes payload.

    - bt is dtype-aware (multiples of 8 * rows-per-sublane for the dtype).
    - Blocks grow taller (bt) before wider (lt) to keep the padded enc buffer small.
    - lt is a multiple of 128 (or the full L) and re-balanced so L blocks are uniform.
    - Never collapses to a single block when the total payload is non-trivial
      (keeps both v7x TensorCores fed under "parallel" semantics).
    """
    pack = max(1, 4 // max(itemsize, 1))   # 1 (f32), 2 (bf16/f16), 4 (int8/fp8)
    sub = 8 * pack                         # rows per fully-packed vreg sublane dim

    # --- batch tile: fill sublanes; grow in multiples of `sub` when B allows ---
    if B <= sub:
        bt = B                                             # block == full batch dim
    else:
        bt = (B // sub) * sub
        # keep bt small enough that lt >= 128 lanes still fits the target block
        max_bt = max(sub, (target_block_bytes // (128 * itemsize)) // sub * sub)
        bt = max(sub, min(bt, max_bt))

    # --- L tile: lane-dense, balanced ---
    row_bytes = L * itemsize
    if bt * row_bytes <= target_block_bytes:
        lt = L
    else:
        lt_raw = max(128, (target_block_bytes // (bt * itemsize)) // 128 * 128)
        n_l = pl.cdiv(L, lt_raw)
        if n_l > 1 and n_l % 2 == 1:
            n_l += 1                     # prefer an even block count (megacore split)
        lt = min(L, pl.cdiv(pl.cdiv(L, n_l), 128) * 128)

    # --- never strand a v7x TensorCore on a single-block grid ---
    total_bytes = B * L * itemsize
    n_blocks = pl.cdiv(L, lt) * pl.cdiv(B, bt)
    if n_blocks == 1 and total_bytes > (512 << 10) and L >= 256:
        lt_half = pl.cdiv(pl.cdiv(L, 2), 128) * 128
        if lt_half < L:
            lt = lt_half

    return bt, lt


def positional_encoding_2d(
    x: jnp.ndarray,
    encoding: jnp.ndarray,
    *,
    target_block_bytes: int = 4 << 20,
    vmem_limit_bytes: int = 48 << 20,
    donate_x: bool = False,
) -> jnp.ndarray:
    """Forward pass: x [B, S, D] + encoding [S, D] (broadcast over batch)."""
    B, S, D = x.shape
    assert encoding.shape == (S, D)
    enc = encoding.astype(x.dtype)  # avoid mixed-dtype add / implicit store cast

    L = S * D
    x2 = x.reshape(B, L)          # lane-dense flattened view (free, contiguous)
    e2 = enc.reshape(1, L)

    itemsize = jnp.dtype(x.dtype).itemsize
    bt, lt = _choose_tiles(B, L, itemsize, target_block_bytes)

    grid = (pl.cdiv(L, lt), pl.cdiv(B, bt))  # L outer, B inner: enc tile stays resident

    out2 = pl.pallas_call(
        _add_pe_kernel,
        out_shape=jax.ShapeDtypeStruct((B, L), x.dtype),
        grid_spec=pltpu.PrefetchScalarGridSpec(
            num_scalar_prefetch=0,
            grid=grid,
            in_specs=[
                pl.BlockSpec((bt, lt), lambda l, b: (b, l)),   # x tile
                pl.BlockSpec((1, lt), lambda l, b: (0, l)),    # enc tile (const over b)
            ],
            out_specs=pl.BlockSpec((bt, lt), lambda l, b: (b, l)),
        ),
        compiler_params=pltpu.CompilerParams(
            dimension_semantics=("parallel", "parallel"),
            vmem_limit_bytes=vmem_limit_bytes,
        ),
        input_output_aliases=({0: 0} if donate_x else {}),
    )(x2, e2)
    return out2.reshape(B, S, D)


if __name__ == "__main__":
    key = jax.random.PRNGKey(0)

    # --- Small shape consistent with the module (DiT token input). ---
    batch = 2
    dim_model = 32            # divisible by 4 as the module implies
    grid_size = 16
    seq = grid_size * grid_size  # 256

    x = jax.random.normal(key, (batch, seq, dim_model), dtype=jnp.float32)
    encoding = build_encoding(dim_model, grid_size, dtype=x.dtype)

    out = positional_encoding_2d(x, encoding)
    out = jax.block_until_ready(out)

    ref = x + encoding[None, :, :]
    assert out.shape == (batch, seq, dim_model)
    assert out.dtype == x.dtype
    assert bool(jnp.allclose(out, ref, atol=1e-6, rtol=1e-6))

    # --- Second check exercising the multi-block path (tiled L, ragged B). ---
    b2, dm2, gs2 = 10, 64, 8                      # B=10 -> bt=8 with ragged edge
    s2 = gs2 * gs2
    k1, k2 = jax.random.split(key)
    x2 = jax.random.normal(k1, (b2, s2, dm2), dtype=jnp.float32)
    enc2 = build_encoding(dm2, gs2, dtype=x2.dtype)
    out2 = positional_encoding_2d(x2, enc2, target_block_bytes=16 * 1024)  # force L tiling
    out2 = jax.block_until_ready(out2)
    ref2 = x2 + enc2[None, :, :]
    assert bool(jnp.allclose(out2, ref2, atol=1e-6, rtol=1e-6))

    # --- Third check: bf16 path exercising dtype-aware sublane packing (bt=16). ---
    b3, dm3, gs3 = 20, 32, 8
    s3 = gs3 * gs3
    x3 = jax.random.normal(k2, (b3, s3, dm3), dtype=jnp.float32).astype(jnp.bfloat16)
    enc3 = build_encoding(dm3, gs3, dtype=jnp.bfloat16)
    out3 = positional_encoding_2d(x3, enc3)
    out3 = jax.block_until_ready(out3)
    ref3 = x3 + enc3[None, :, :]          # same bf16 add as the kernel performs
    assert out3.dtype == jnp.bfloat16
    assert bool(jnp.allclose(out3.astype(jnp.float32), ref3.astype(jnp.float32),
                             atol=1e-2, rtol=1e-2))

    print("KERNEL_OK")
</pallas_src>

<mosaic_0001>
module attributes {stable_mosaic.version = 11 : i64} {
  func.func @_add_pe_kernel(%arg0: i32, %arg1: i32, %arg2: memref<2x8192xf32, #tpu.memory_space<vmem>>, %arg3: memref<1x8192xf32, #tpu.memory_space<vmem>>, %arg4: memref<2x8192xf32, #tpu.memory_space<vmem>>) attributes {dimension_semantics = [#tpu.dimension_semantics<parallel>, #tpu.dimension_semantics<parallel>], iteration_bounds = array<i64: 1, 1>, scalar_prefetch = 0 : i64, scratch_operands = 0 : i64, tpu.core_type = #tpu.core_type<tc>, window_params = [{transform_indices = @transform_0, window_bounds = array<i64: 2, 8192>}, {transform_indices = @transform_1, window_bounds = array<i64: 1, 8192>}, {transform_indices = @transform_2, window_bounds = array<i64: 2, 8192>}]} {
    %c0 = arith.constant 0 : index
    %c0_0 = arith.constant 0 : index
    %0 = vector.load %arg2[%c0, %c0_0] : memref<2x8192xf32, #tpu.memory_space<vmem>>, vector<2x8192xf32>
    %c0_1 = arith.constant 0 : index
    %c0_2 = arith.constant 0 : index
    %1 = vector.load %arg3[%c0_1, %c0_2] : memref<1x8192xf32, #tpu.memory_space<vmem>>, vector<1x8192xf32>
    %2 = vector.broadcast %1 : vector<1x8192xf32> to vector<2x8192xf32>
    %3 = arith.addf %0, %2 : vector<2x8192xf32>
    %c0_3 = arith.constant 0 : index
    %c0_4 = arith.constant 0 : index
    %4 = vector.load %arg4[%c0_3, %c0_4] : memref<2x8192xf32, #tpu.memory_space<vmem>>, vector<2x8192xf32>
    tpu.vector_store %arg4[%c0_3, %c0_4], %3 {strides = array<i32>} : memref<2x8192xf32, #tpu.memory_space<vmem>>, vector<2x8192xf32>,
    return
  }
  func.func @transform_0(%arg0: i32, %arg1: i32) -> (i32, i32) {
    %c0_i32 = arith.constant 0 : i32
    return %arg1, %arg0 : i32, i32
  }
  func.func @transform_1(%arg0: i32, %arg1: i32) -> (i32, i32) {
    %c0_i32 = arith.constant 0 : i32
    %c0_i32_0 = arith.constant 0 : i32
    return %c0_i32, %arg0 : i32, i32
  }
  func.func @transform_2(%arg0: i32, %arg1: i32) -> (i32, i32) {
    %c0_i32 = arith.constant 0 : i32
    return %arg1, %arg0 : i32, i32
  }
}

</mosaic_0001>

<llo_original>
// kernel: tpu_custom_call.1
$region0: #{tpu_custom_call.1}
  #allocation0 [shape = 'u32[]', space=smem, size = 0x4, offset = 0x4, fixed_abs, tag = 'smem constant byte address 0x4 - core index']
  #allocation1 [shape = 'u32[144,128]{1,0:T(1,128)}', space=vmem, size = 0x12000, scoped, tag = 'internal scratch']
  %s0 = inlined_call_operand.hbm [shape: f32[2,8192], index: 0, kind: input, shape index: {}]
  %s1 = inlined_call_operand.hbm [shape: f32[1,8192], index: 1, kind: input, shape index: {}]
  %s2 = inlined_call_operand.hbm [shape: f32[2,8192], index: 2, kind: output, shape index: {}]
  %s3 = sld [smem:[#allocation0]]
  $region26: #{tpu_custom_call.1} parent=0
    _
  %s5 = ssub.s32 1, %s3
  %s6 = scalar_select 0, %s5, %s3
  $region1: #{tpu_custom_call.1} parent=0
    #allocation2 [shape = 'u8[65536]{0}', space=vmem, size = 0x10000, scoped, tag = 'input window, operand 0, single buffered']
    #allocation3 [shape = 's32[1]{0}', space=sflag, size = 0x4, scoped, tag = 'scoped memory for tpu_custom_call.1']
    #allocation4 [shape = 's32[1]{0}', space=sflag, size = 0x4, scoped, tag = 'scoped memory for tpu_custom_call.1']
    #allocation5 [shape = 'u8[32768]{0}', space=vmem, size = 0x8000, scoped, tag = 'input window, operand 1, single buffered']
    #allocation6 [shape = 's32[1]{0}', space=sflag, size = 0x4, scoped, tag = 'scoped memory for tpu_custom_call.1']
    #allocation7 [shape = 'u8[65536]{0}', space=vmem, size = 0x10000, scoped, tag = 'output window, operand 0, single buffered']
    %7 = vsyncpa [#allocation3], 0
    %8 = vsyncpa [#allocation6], 0
    %9 = vsyncpa [#allocation4], 0
    // Predicated region
    $region2: #{tpu_custom_call.1} parent=1 // pred_check
      _
    $region3: #{tpu_custom_call.1} parent=1 // pred_check_branch
      %11 = sbr.rel (0) target = $region5
    $region4: #{tpu_custom_call.1} parent=1 // pred_region
      %s13 = ssub.s32 2048, 2048
      %14 = vsyncadd [#allocation3], %s13
      %s16 = sshll.u32 [#allocation2], 4
      %s17 = int_to_ptr.vmem [resolvable:$true] %s16
      %19 = dma.hbm_to_vmem [thread:$0]  %s0, 2048, %s17, [#allocation3]
    $region5: #{tpu_custom_call.1} parent=1 // pred_fallthru
      _
    // Predicated region
    $region6: #{tpu_custom_call.1} parent=1 // pred_check
      _
    $region7: #{tpu_custom_call.1} parent=1 // pred_check_branch
      %21 = sbr.rel (0) target = $region9
    $region8: #{tpu_custom_call.1} parent=1 // pred_region
      %s23 = ssub.s32 1024, 1024
      %24 = vsyncadd [#allocation6], %s23
      %s26 = sshll.u32 [#allocation5], 4
      %s27 = int_to_ptr.vmem [resolvable:$true] %s26
      %29 = dma.hbm_to_vmem [thread:$0]  %s1, 1024, %s27, [#allocation6]
    $region9: #{tpu_custom_call.1} parent=1 // pred_fallthru
      _
    // Predicated region
    $region10: #{tpu_custom_call.1} parent=1 // pred_check
      _
    $region11: #{tpu_custom_call.1} parent=1 // pred_check_branch
      %31 = sbr.rel (0) target = $region13
    $region12: #{tpu_custom_call.1} parent=1 // pred_region
      %32 = dma.done [#allocation3], 2048
    $region13: #{tpu_custom_call.1} parent=1 // pred_fallthru
      _
    // Predicated region
    $region14: #{tpu_custom_call.1} parent=1 // pred_check
      _
    $region15: #{tpu_custom_call.1} parent=1 // pred_check_branch
      %34 = sbr.rel (0) target = $region17
    $region16: #{tpu_custom_call.1} parent=1 // pred_region
      %35 = dma.done [#allocation6], 1024
    $region17: #{tpu_custom_call.1} parent=1 // pred_fallthru
      _
    %v36 = vld [vmem:[#allocation2] sm:$0xff]
    %v37 = vld [vmem:[#allocation2 + $0x8] sm:$0xff]
    %v38 = vld [vmem:[#allocation2 + $0x10] sm:$0xff]
    %v39 = vld [vmem:[#allocation2 + $0x18] sm:$0xff]
    %v40 = vld [vmem:[#allocation2 + $0x20] sm:$0xff]
    %v41 = vld [vmem:[#allocation2 + $0x28] sm:$0xff]
    %v42 = vld [vmem:[#allocation2 + $0x30] sm:$0xff]
    %v43 = vld [vmem:[#allocation2 + $0x38] sm:$0xff]
    %v44 = vld [vmem:[#allocation2 + $0x40] sm:$0xff]
    %v45 = vld [vmem:[#allocation2 + $0x48] sm:$0xff]
    %v46 = vld [vmem:[#allocation2 + $0x50] sm:$0xff]
    %v47 = vld [vmem:[#allocation2 + $0x58] sm:$0xff]
    %v48 = vld [vmem:[#allocation2 + $0x60] sm:$0xff]
    %v49 = vld [vmem:[#allocation2 + $0x68] sm:$0xff]
    %v50 = vld [vmem:[#allocation2 + $0x70] sm:$0xff]
    %v51 = vld [vmem:[#allocation2 + $0x78] sm:$0xff]
    %v52 = vld [vmem:[#allocation5] sm:$0xff]
    %v53 = vld [vmem:[#allocation5 + $0x8] sm:$0xff]
    %v54 = vld [vmem:[#allocation5 + $0x10] sm:$0xff]
    %v55 = vld [vmem:[#allocation5 + $0x18] sm:$0xff]
    %v56 = vld [vmem:[#allocation5 + $0x20] sm:$0xff]
    %v57 = vld [vmem:[#allocation5 + $0x28] sm:$0xff]
    %v58 = vld [vmem:[#allocation5 + $0x30] sm:$0xff]
    %v59 = vld [vmem:[#allocation5 + $0x38] sm:$0xff]
    %v68 = vlaneseq
    %v69 = vshrl.u32 %v68, 7
    %v70 = vsub.s32 0, %v69
    %v71 = vrot.slane %v52, %v70
    %v72 = vlaneseq
    %v73 = vshrl.u32 %v72, 7
    %v74 = vsub.s32 1, %v73
    %v75 = vrot.slane %v52, %v74
    %v76 = vlaneseq
    %v77 = vshrl.u32 %v76, 7
    %v78 = vsub.s32 2, %v77
    %v79 = vrot.slane %v52, %v78
    %v80 = vlaneseq
    %v81 = vshrl.u32 %v80, 7
    %v82 = vsub.s32 3, %v81
    %v83 = vrot.slane %v52, %v82
    %v84 = vlaneseq
    %v85 = vshrl.u32 %v84, 7
    %v86 = vsub.s32 4, %v85
    %v87 = vrot.slane %v52, %v86
    %v88 = vlaneseq
    %v89 = vshrl.u32 %v88, 7
    %v90 = vsub.s32 5, %v89
    %v91 = vrot.slane %v52, %v90
    %v92 = vlaneseq
    %v93 = vshrl.u32 %v92, 7
    %v94 = vsub.s32 6, %v93
    %v95 = vrot.slane %v52, %v94
    %v96 = vlaneseq
    %v97 = vshrl.u32 %v96, 7
    %v98 = vsub.s32 7, %v97
    %v99 = vrot.slane %v52, %v98
    %v100 = vlaneseq
    %v101 = vshrl.u32 %v100, 7
    %v102 = vsub.s32 0, %v101
    %v103 = vrot.slane %v53, %v102
    %v104 = vlaneseq
    %v105 = vshrl.u32 %v104, 7
    %v106 = vsub.s32 1, %v105
    %v107 = vrot.slane %v53, %v106
    %v108 = vlaneseq
    %v109 = vshrl.u32 %v108, 7
    %v110 = vsub.s32 2, %v109
    %v111 = vrot.slane %v53, %v110
    %v112 = vlaneseq
    %v113 = vshrl.u32 %v112, 7
    %v114 = vsub.s32 3, %v113
    %v115 = vrot.slane %v53, %v114
    %v116 = vlaneseq
    %v117 = vshrl.u32 %v116, 7
    %v118 = vsub.s32 4, %v117
    %v119 = vrot.slane %v53, %v118
    %v120 = vlaneseq
    %v121 = vshrl.u32 %v120, 7
    %v122 = vsub.s32 5, %v121
    %v123 = vrot.slane %v53, %v122
    %v124 = vlaneseq
    %v125 = vshrl.u32 %v124, 7
    %v126 = vsub.s32 6, %v125
    %v127 = vrot.slane %v53, %v126
    %v128 = vlaneseq
    %v129 = vshrl.u32 %v128, 7
    %v130 = vsub.s32 7, %v129
    %v131 = vrot.slane %v53, %v130
    %v132 = vlaneseq
    %v133 = vshrl.u32 %v132, 7
    %v134 = vsub.s32 0, %v133
    %v135 = vrot.slane %v54, %v134
    %v136 = vlaneseq
    %v137 = vshrl.u32 %v136, 7
    %v138 = vsub.s32 1, %v137
    %v139 = vrot.slane %v54, %v138
    %v140 = vlaneseq
    %v141 = vshrl.u32 %v140, 7
    %v142 = vsub.s32 2, %v141
    %v143 = vrot.slane %v54, %v142
    %v144 = vlaneseq
    %v145 = vshrl.u32 %v144, 7
    %v146 = vsub.s32 3, %v145
    %v147 = vrot.slane %v54, %v146
    %v148 = vlaneseq
    %v149 = vshrl.u32 %v148, 7
    %v150 = vsub.s32 4, %v149
    %v151 = vrot.slane %v54, %v150
    %v152 = vlaneseq
    %v153 = vshrl.u32 %v152, 7
    %v154 = vsub.s32 5, %v153
    %v155 = vrot.slane %v54, %v154
    %v156 = vlaneseq
    %v157 = vshrl.u32 %v156, 7
    %v158 = vsub.s32 6, %v157
    %v159 = vrot.slane %v54, %v158
    %v160 = vlaneseq
    %v161 = vshrl.u32 %v160, 7
    %v162 = vsub.s32 7, %v161
    %v163 = vrot.slane %v54, %v162
    %v164 = vlaneseq
    %v165 = vshrl.u32 %v164, 7
    %v166 = vsub.s32 0, %v165
    %v167 = vrot.slane %v55, %v166
    %v168 = vlaneseq
    %v169 = vshrl.u32 %v168, 7
    %v170 = vsub.s32 1, %v169
    %v171 = vrot.slane %v55, %v170
    %v172 = vlaneseq
    %v173 = vshrl.u32 %v172, 7
    %v174 = vsub.s32 2, %v173
    %v175 = vrot.slane %v55, %v174
    %v176 = vlaneseq
    %v177 = vshrl.u32 %v176, 7
    %v178 = vsub.s32 3, %v177
    %v179 = vrot.slane %v55, %v178
    %v180 = vlaneseq
    %v181 = vshrl.u32 %v180, 7
    %v182 = vsub.s32 4, %v181
    %v183 = vrot.slane %v55, %v182
    %v184 = vlaneseq
    %v185 = vshrl.u32 %v184, 7
    %v186 = vsub.s32 5, %v185
    %v187 = vrot.slane %v55, %v186
    %v188 = vlaneseq
    %v189 = vshrl.u32 %v188, 7
    %v190 = vsub.s32 6, %v189
    %v191 = vrot.slane %v55, %v190
    %v192 = vlaneseq
    %v193 = vshrl.u32 %v192, 7
    %v194 = vsub.s32 7, %v193
    %v195 = vrot.slane %v55, %v194
    %v196 = vlaneseq
    %v197 = vshrl.u32 %v196, 7
    %v198 = vsub.s32 0, %v197
    %v199 = vrot.slane %v56, %v198
    %v200 = vlaneseq
    %v201 = vshrl.u32 %v200, 7
    %v202 = vsub.s32 1, %v201
    %v203 = vrot.slane %v56, %v202
    %v204 = vlaneseq
    %v205 = vshrl.u32 %v204, 7
    %v206 = vsub.s32 2, %v205
    %v207 = vrot.slane %v56, %v206
    %v208 = vlaneseq
    %v209 = vshrl.u32 %v208, 7
    %v210 = vsub.s32 3, %v209
    %v211 = vrot.slane %v56, %v210
    %v212 = vlaneseq
    %v213 = vshrl.u32 %v212, 7
    %v214 = vsub.s32 4, %v213
    %v215 = vrot.slane %v56, %v214
    %v216 = vlaneseq
    %v217 = vshrl.u32 %v216, 7
    %v218 = vsub.s32 5, %v217
    %v219 = vrot.slane %v56, %v218
    %v220 = vlaneseq
    %v221 = vshrl.u32 %v220, 7
    %v222 = vsub.s32 6, %v221
    %v223 = vrot.slane %v56, %v222
    %v224 = vlaneseq
    %v225 = vshrl.u32 %v224, 7
    %v226 = vsub.s32 7, %v225
    %v227 = vrot.slane %v56, %v226
    %v228 = vlaneseq
    %v229 = vshrl.u32 %v228, 7
    %v230 = vsub.s32 0, %v229
    %v231 = vrot.slane %v57, %v230
    %v232 = vlaneseq
    %v233 = vshrl.u32 %v232, 7
    %v234 = vsub.s32 1, %v233
    %v235 = vrot.slane %v57, %v234
    %v236 = vlaneseq
    %v237 = vshrl.u32 %v236, 7
    %v238 = vsub.s32 2, %v237
    %v239 = vrot.slane %v57, %v238
    %v240 = vlaneseq
    %v241 = vshrl.u32 %v240, 7
    %v242 = vsub.s32 3, %v241
    %v243 = vrot.slane %v57, %v242
    %v244 = vlaneseq
    %v245 = vshrl.u32 %v244, 7
    %v246 = vsub.s32 4, %v245
    %v247 = vrot.slane %v57, %v246
    %v248 = vlaneseq
    %v249 = vshrl.u32 %v248, 7
    %v250 = vsub.s32 5, %v249
    %v251 = vrot.slane %v57, %v250
    %v252 = vlaneseq
    %v253 = vshrl.u32 %v252, 7
    %v254 = vsub.s32 6, %v253
    %v255 = vrot.slane %v57, %v254
    %v256 = vlaneseq
    %v257 = vshrl.u32 %v256, 7
    %v258 = vsub.s32 7, %v257
    %v259 = vrot.slane %v57, %v258
    %v260 = vlaneseq
    %v261 = vshrl.u32 %v260, 7
    %v262 = vsub.s32 0, %v261
    %v263 = vrot.slane %v58, %v262
    %v264 = vlaneseq
    %v265 = vshrl.u32 %v264, 7
    %v266 = vsub.s32 1, %v265
    %v267 = vrot.slane %v58, %v266
    %v268 = vlaneseq
    %v269 = vshrl.u32 %v268, 7
    %v270 = vsub.s32 2, %v269
    %v271 = vrot.slane %v58, %v270
    %v272 = vlaneseq
    %v273 = vshrl.u32 %v272, 7
    %v274 = vsub.s32 3, %v273
    %v275 = vrot.slane %v58, %v274
    %v276 = vlaneseq
    %v277 = vshrl.u32 %v276, 7
    %v278 = vsub.s32 4, %v277
    %v279 = vrot.slane %v58, %v278
    %v280 = vlaneseq
    %v281 = vshrl.u32 %v280, 7
    %v282 = vsub.s32 5, %v281
    %v283 = vrot.slane %v58, %v282
    %v284 = vlaneseq
    %v285 = vshrl.u32 %v284, 7
    %v286 = vsub.s32 6, %v285
    %v287 = vrot.slane %v58, %v286
    %v288 = vlaneseq
    %v289 = vshrl.u32 %v288, 7
    %v290 = vsub.s32 7, %v289
    %v291 = vrot.slane %v58, %v290
    %v292 = vlaneseq
    %v293 = vshrl.u32 %v292, 7
    %v294 = vsub.s32 0, %v293
    %v295 = vrot.slane %v59, %v294
    %v296 = vlaneseq
    %v297 = vshrl.u32 %v296, 7
    %v298 = vsub.s32 1, %v297
    %v299 = vrot.slane %v59, %v298
    %v300 = vlaneseq
    %v301 = vshrl.u32 %v300, 7
    %v302 = vsub.s32 2, %v301
    %v303 = vrot.slane %v59, %v302
    %v304 = vlaneseq
    %v305 = vshrl.u32 %v304, 7
    %v306 = vsub.s32 3, %v305
    %v307 = vrot.slane %v59, %v306
    %v308 = vlaneseq
    %v309 = vshrl.u32 %v308, 7
    %v310 = vsub.s32 4, %v309
    %v311 = vrot.slane %v59, %v310
    %v312 = vlaneseq
    %v313 = vshrl.u32 %v312, 7
    %v314 = vsub.s32 5, %v313
    %v315 = vrot.slane %v59, %v314
    %v316 = vlaneseq
    %v317 = vshrl.u32 %v316, 7
    %v318 = vsub.s32 6, %v317
    %v319 = vrot.slane %v59, %v318
    %v320 = vlaneseq
    %v321 = vshrl.u32 %v320, 7
    %v322 = vsub.s32 7, %v321
    %v323 = vrot.slane %v59, %v322
    %v324 = vcombine.low %v71, %v75
    %v325 = vcombine.low %v79, %v83
    %v327 = vunpack.c.l.s4 1983009808
    %v328 = vunpack.c.0.s8 %v327
    %v329 = vlaneseq
    %v330 = vshrl.u32 %v329, 7
    %v331 = vsub.s32 %v328, %v330
    %v332 = vrot.slane %v324, %v331
    %v334 = vunpack.c.l.s4 1983009808
    %v335 = vunpack.c.0.s8 %v334
    %v336 = vlaneseq
    %v337 = vshrl.u32 %v336, 7
    %v338 = vsub.s32 %v335, %v337
    %v339 = vrot.slane %v325, %v338
    %v340 = vcombine.low %v332, %v339
    %v341 = vcombine.low %v87, %v91
    %v342 = vcombine.low %v95, %v99
    %v344 = vunpack.c.l.s4 1983009808
    %v345 = vunpack.c.0.s8 %v344
    %v346 = vlaneseq
    %v347 = vshrl.u32 %v346, 7
    %v348 = vsub.s32 %v345, %v347
    %v349 = vrot.slane %v341, %v348
    %v351 = vunpack.c.l.s4 1983009808
    %v352 = vunpack.c.0.s8 %v351
    %v353 = vlaneseq
    %v354 = vshrl.u32 %v353, 7
    %v355 = vsub.s32 %v352, %v354
    %v356 = vrot.slane %v342, %v355
    %v357 = vcombine.low %v349, %v356
    %v358 = vcombine.low %v103, %v107
    %v359 = vcombine.low %v111, %v115
    %v361 = vunpack.c.l.s4 1983009808
    %v362 = vunpack.c.0.s8 %v361
    %v363 = vlaneseq
    %v364 = vshrl.u32 %v363, 7
    %v365 = vsub.s32 %v362, %v364
    %v366 = vrot.slane %v358, %v365
    %v368 = vunpack.c.l.s4 1983009808
    %v369 = vunpack.c.0.s8 %v368
    %v370 = vlaneseq
    %v371 = vshrl.u32 %v370, 7
    %v372 = vsub.s32 %v369, %v371
    %v373 = vrot.slane %v359, %v372
    %v374 = vcombine.low %v366, %v373
    %v375 = vcombine.low %v119, %v123
    %v376 = vcombine.low %v127, %v131
    %v378 = vunpack.c.l.s4 1983009808
    %v379 = vunpack.c.0.s8 %v378
    %v380 = vlaneseq
    %v381 = vshrl.u32 %v380, 7
    %v382 = vsub.s32 %v379, %v381
    %v383 = vrot.slane %v375, %v382
    %v385 = vunpack.c.l.s4 1983009808
    %v386 = vunpack.c.0.s8 %v385
    %v387 = vlaneseq
    %v388 = vshrl.u32 %v387, 7
    %v389 = vsub.s32 %v386, %v388
    %v390 = vrot.slane %v376, %v389
    %v391 = vcombine.low %v383, %v390
    %v392 = vcombine.low %v135, %v139
    %v393 = vcombine.low %v143, %v147
    %v395 = vunpack.c.l.s4 1983009808
    %v396 = vunpack.c.0.s8 %v395
    %v397 = vlaneseq
    %v398 = vshrl.u32 %v397, 7
    %v399 = vsub.s32 %v396, %v398
    %v400 = vrot.slane %v392, %v399
    %v402 = vunpack.c.l.s4 1983009808
    %v403 = vunpack.c.0.s8 %v402
    %v404 = vlaneseq
    %v405 = vshrl.u32 %v404, 7
    %v406 = vsub.s32 %v403, %v405
    %v407 = vrot.slane %v393, %v406
    %v408 = vcombine.low %v400, %v407
    %v409 = vcombine.low %v151, %v155
    %v410 = vcombine.low %v159, %v163
    %v412 = vunpack.c.l.s4 1983009808
    %v413 = vunpack.c.0.s8 %v412
    %v414 = vlaneseq
    %v415 = vshrl.u32 %v414, 7
    %v416 = vsub.s32 %v413, %v415
    %v417 = vrot.slane %v409, %v416
    %v419 = vunpack.c.l.s4 1983009808
    %v420 = vunpack.c.0.s8 %v419
    %v421 = vlaneseq
    %v422 = vshrl.u32 %v421, 7
    %v423 = vsub.s32 %v420, %v422
    %v424 = vrot.slane %v410, %v423
    %v425 = vcombine.low %v417, %v424
    %v426 = vcombine.low %v167, %v171
    %v427 = vcombine.low %v175, %v179
    %v429 = vunpack.c.l.s4 1983009808
    %v430 = vunpack.c.0.s8 %v429
    %v431 = vlaneseq
    %v432 = vshrl.u32 %v431, 7
    %v433 = vsub.s32 %v430, %v432
    %v434 = vrot.slane %v426, %v433
    %v436 = vunpack.c.l.s4 1983009808
    %v437 = vunpack.c.0.s8 %v436
    %v438 = vlaneseq
    %v439 = vshrl.u32 %v438, 7
    %v440 = vsub.s32 %v437, %v439
    %v441 = vrot.slane %v427, %v440
    %v442 = vcombine.low %v434, %v441
    %v443 = vcombine.low %v183, %v187
    %v444 = vcombine.low %v191, %v195
    %v446 = vunpack.c.l.s4 1983009808
    %v447 = vunpack.c.0.s8 %v446
    %v448 = vlaneseq
    %v449 = vshrl.u32 %v448, 7
    %v450 = vsub.s32 %v447, %v449
    %v451 = vrot.slane %v443, %v450
    %v453 = vunpack.c.l.s4 1983009808
    %v454 = vunpack.c.0.s8 %v453
    %v455 = vlaneseq
    %v456 = vshrl.u32 %v455, 7
    %v457 = vsub.s32 %v454, %v456
    %v458 = vrot.slane %v444, %v457
    %v459 = vcombine.low %v451, %v458
    %v460 = vcombine.low %v199, %v203
    %v461 = vcombine.low %v207, %v211
    %v463 = vunpack.c.l.s4 1983009808
    %v464 = vunpack.c.0.s8 %v463
    %v465 = vlaneseq
    %v466 = vshrl.u32 %v465, 7
    %v467 = vsub.s32 %v464, %v466
    %v468 = vrot.slane %v460, %v467
    %v470 = vunpack.c.l.s4 1983009808
    %v471 = vunpack.c.0.s8 %v470
    %v472 = vlaneseq
    %v473 = vshrl.u32 %v472, 7
    %v474 = vsub.s32 %v471, %v473
    %v475 = vrot.slane %v461, %v474
    %v476 = vcombine.low %v468, %v475
    %v477 = vcombine.low %v215, %v219
    %v478 = vcombine.low %v223, %v227
    %v480 = vunpack.c.l.s4 1983009808
    %v481 = vunpack.c.0.s8 %v480
    %v482 = vlaneseq
    %v483 = vshrl.u32 %v482, 7
    %v484 = vsub.s32 %v481, %v483
    %v485 = vrot.slane %v477, %v484
    %v487 = vunpack.c.l.s4 1983009808
    %v488 = vunpack.c.0.s8 %v487
    %v489 = vlaneseq
    %v490 = vshrl.u32 %v489, 7
    %v491 = vsub.s32 %v488, %v490
    %v492 = vrot.slane %v478, %v491
    %v493 = vcombine.low %v485, %v492
    %v494 = vcombine.low %v231, %v235
    %v495 = vcombine.low %v239, %v243
    %v497 = vunpack.c.l.s4 1983009808
    %v498 = vunpack.c.0.s8 %v497
    %v499 = vlaneseq
    %v500 = vshrl.u32 %v499, 7
    %v501 = vsub.s32 %v498, %v500
    %v502 = vrot.slane %v494, %v501
    %v504 = vunpack.c.l.s4 1983009808
    %v505 = vunpack.c.0.s8 %v504
    %v506 = vlaneseq
    %v507 = vshrl.u32 %v506, 7
    %v508 = vsub.s32 %v505, %v507
    %v509 = vrot.slane %v495, %v508
    %v510 = vcombine.low %v502, %v509
    %v511 = vcombine.low %v247, %v251
    %v512 = vcombine.low %v255, %v259
    %v514 = vunpack.c.l.s4 1983009808
    %v515 = vunpack.c.0.s8 %v514
    %v516 = vlaneseq
    %v517 = vshrl.u32 %v516, 7
    %v518 = vsub.s32 %v515, %v517
    %v519 = vrot.slane %v511, %v518
    %v521 = vunpack.c.l.s4 1983009808
    %v522 = vunpack.c.0.s8 %v521
    %v523 = vlaneseq
    %v524 = vshrl.u32 %v523, 7
    %v525 = vsub.s32 %v522, %v524
    %v526 = vrot.slane %v512, %v525
    %v527 = vcombine.low %v519, %v526
    %v528 = vcombine.low %v263, %v267
    %v529 = vcombine.low %v271, %v275
    %v531 = vunpack.c.l.s4 1983009808
    %v532 = vunpack.c.0.s8 %v531
    %v533 = vlaneseq
    %v534 = vshrl.u32 %v533, 7
    %v535 = vsub.s32 %v532, %v534
    %v536 = vrot.slane %v528, %v535
    %v538 = vunpack.c.l.s4 1983009808
    %v539 = vunpack.c.0.s8 %v538
    %v540 = vlaneseq
    %v541 = vshrl.u32 %v540, 7
    %v542 = vsub.s32 %v539, %v541
    %v543 = vrot.slane %v529, %v542
    %v544 = vcombine.low %v536, %v543
    %v545 = vcombine.low %v279, %v283
    %v546 = vcombine.low %v287, %v291
    %v548 = vunpack.c.l.s4 1983009808
    %v549 = vunpack.c.0.s8 %v548
    %v550 = vlaneseq
    %v551 = vshrl.u32 %v550, 7
    %v552 = vsub.s32 %v549, %v551
    %v553 = vrot.slane %v545, %v552
    %v555 = vunpack.c.l.s4 1983009808
    %v556 = vunpack.c.0.s8 %v555
    %v557 = vlaneseq
    %v558 = vshrl.u32 %v557, 7
    %v559 = vsub.s32 %v556, %v558
    %v560 = vrot.slane %v546, %v559
    %v561 = vcombine.low %v553, %v560
    %v562 = vcombine.low %v295, %v299
    %v563 = vcombine.low %v303, %v307
    %v565 = vunpack.c.l.s4 1983009808
    %v566 = vunpack.c.0.s8 %v565
    %v567 = vlaneseq
    %v568 = vshrl.u32 %v567, 7
    %v569 = vsub.s32 %v566, %v568
    %v570 = vrot.slane %v562, %v569
    %v572 = vunpack.c.l.s4 1983009808
    %v573 = vunpack.c.0.s8 %v572
    %v574 = vlaneseq
    %v575 = vshrl.u32 %v574, 7
    %v576 = vsub.s32 %v573, %v575
    %v577 = vrot.slane %v563, %v576
    %v578 = vcombine.low %v570, %v577
    %v579 = vcombine.low %v311, %v315
    %v580 = vcombine.low %v319, %v323
    %v582 = vunpack.c.l.s4 1983009808
    %v583 = vunpack.c.0.s8 %v582
    %v584 = vlaneseq
    %v585 = vshrl.u32 %v584, 7
    %v586 = vsub.s32 %v583, %v585
    %v587 = vrot.slane %v579, %v586
    %v589 = vunpack.c.l.s4 1983009808
    %v590 = vunpack.c.0.s8 %v589
    %v591 = vlaneseq
    %v592 = vshrl.u32 %v591, 7
    %v593 = vsub.s32 %v590, %v592
    %v594 = vrot.slane %v580, %v593
    %v595 = vcombine.low %v587, %v594
    %v612 = vadd.f32 %v36, %v340
    %v613 = vadd.f32 %v37, %v357
    %v614 = vadd.f32 %v38, %v374
    %v615 = vadd.f32 %v39, %v391
    %v616 = vadd.f32 %v40, %v408
    %v617 = vadd.f32 %v41, %v425
    %v618 = vadd.f32 %v42, %v442
    %v619 = vadd.f32 %v43, %v459
    %v620 = vadd.f32 %v44, %v476
    %v621 = vadd.f32 %v45, %v493
    %v622 = vadd.f32 %v46, %v510
    %v623 = vadd.f32 %v47, %v527
    %v624 = vadd.f32 %v48, %v544
    %v625 = vadd.f32 %v49, %v561
    %v626 = vadd.f32 %v50, %v578
    %v627 = vadd.f32 %v51, %v595
    %628 = vst [vmem:[#allocation7] sm:$0xff] %v612
    %629 = vst [vmem:[#allocation7 + $0x8] sm:$0xff] %v613
    %630 = vst [vmem:[#allocation7 + $0x10] sm:$0xff] %v614
    %631 = vst [vmem:[#allocation7 + $0x18] sm:$0xff] %v615
    %632 = vst [vmem:[#allocation7 + $0x20] sm:$0xff] %v616
    %633 = vst [vmem:[#allocation7 + $0x28] sm:$0xff] %v617
    %634 = vst [vmem:[#allocation7 + $0x30] sm:$0xff] %v618
    %635 = vst [vmem:[#allocation7 + $0x38] sm:$0xff] %v619
    %636 = vst [vmem:[#allocation7 + $0x40] sm:$0xff] %v620
    %637 = vst [vmem:[#allocation7 + $0x48] sm:$0xff] %v621
    %638 = vst [vmem:[#allocation7 + $0x50] sm:$0xff] %v622
    %639 = vst [vmem:[#allocation7 + $0x58] sm:$0xff] %v623
    %640 = vst [vmem:[#allocation7 + $0x60] sm:$0xff] %v624
    %641 = vst [vmem:[#allocation7 + $0x68] sm:$0xff] %v625
    %642 = vst [vmem:[#allocation7 + $0x70] sm:$0xff] %v626
    %643 = vst [vmem:[#allocation7 + $0x78] sm:$0xff] %v627
    // Predicated region
    $region18: #{tpu_custom_call.1} parent=1 // pred_check
      _
    $region19: #{tpu_custom_call.1} parent=1 // pred_check_branch
      %645 = sbr.rel (0) target = $region21
    $region20: #{tpu_custom_call.1} parent=1 // pred_region
      %s647 = ssub.s32 2048, 2048
      %648 = vsyncadd [#allocation4], %s647
      %s650 = sshll.u32 [#allocation7], 4
      %s651 = int_to_ptr.vmem [resolvable:$true] %s650
      %653 = dma.vmem_to_hbm [thread:$0]  %s651, 2048, %s2, [#allocation4]
    $region21: #{tpu_custom_call.1} parent=1 // pred_fallthru
      _
    // Predicated region
    $region22: #{tpu_custom_call.1} parent=1 // pred_check
      _
    $region23: #{tpu_custom_call.1} parent=1 // pred_check_branch
      %655 = sbr.rel (0) target = $region25
    $region24: #{tpu_custom_call.1} parent=1 // pred_region
      %656 = dma.done [#allocation4], 2048
    $region25: #{tpu_custom_call.1} parent=1 // pred_fallthru
      _
    %657 = vsyncpa [#allocation3], 1
    %658 = vsyncpa [#allocation6], 1
    %659 = vsyncpa [#allocation4], 1

</llo_original>
